<compile_context>
chip_gen: v5e
topology: v5e:2x2
jax: 0.10.0
libtpu: 0.0.40
codegen_flags: <defaults>
</compile_context>

<pallas_src>
import functools

import jax
import jax.numpy as jnp
from jax.experimental import pallas as pl
from jax.experimental.pallas import tpu as pltpu


# ----------------------------------------------------------------------------
# Tiling helpers (budget on real padded VMEM footprint)
# ----------------------------------------------------------------------------

def _pick_lane_tile(hw, budget_bytes, row_bytes):
    """Largest multiple-of-128 divisor of hw with T*row_bytes <= budget, else hw."""
    if hw % 128 != 0:
        return hw                      # block last dim must then equal the full dim
    cap = max(128, (budget_bytes // max(row_bytes, 1)) // 128 * 128)
    t = min(hw, cap)
    while t >= 128:
        if hw % t == 0:
            return t
        t -= 128
    return hw


def _pick_apply_tiles(C, HW, dsize, budget_bytes):
    """Pick (c_tile, T) for a (1, c_tile, T) block: c_tile divides C and is either
    C or a multiple of 8 (sublane rule); padded footprint stays within budget."""
    T = _pick_lane_tile(HW, budget_bytes, dsize)
    legal = [ct for ct in range(1, C + 1)
             if C % ct == 0 and (ct == C or ct % 8 == 0)]
    legal.sort(reverse=True)
    for ct in legal:
        padded_ct = -(-ct // 8) * 8    # sublane padding
        if padded_ct * T * dsize <= budget_bytes:
            return ct, T
    return legal[-1], T                # smallest legal tile; budget is best-effort


# ----------------------------------------------------------------------------
# Kernel 1: ChannelPool (max & mean over channels), lane-dense over spatial
# ----------------------------------------------------------------------------

def _channel_pool_kernel(x_ref, p_ref, *, inv_c):
    # x_ref: (1, C, T) — channels on sublanes, flattened-spatial tile on lanes.
    xv = x_ref[0].astype(jnp.float32)                       # (C, T)
    mx = jnp.max(xv, axis=0, keepdims=True)                 # (1, T)
    mn = jnp.sum(xv, axis=0, keepdims=True) * inv_c         # (1, T)
    p_ref[0] = jnp.concatenate([mx, mn], axis=0)            # (2, T)


def channel_pool(x_flat):
    """x_flat: (B, C, HW) -> pooled (B, 2, HW) f32 with [max, mean] on dim 1."""
    B, C, HW = x_flat.shape
    dsize = x_flat.dtype.itemsize
    T = _pick_lane_tile(HW, 4 << 20, C * dsize)             # ~4 MiB input block
    return pl.pallas_call(
        functools.partial(_channel_pool_kernel, inv_c=1.0 / C),
        grid=(B, HW // T),
        in_specs=[pl.BlockSpec((1, C, T), lambda b, t: (b, 0, t))],
        out_specs=pl.BlockSpec((1, 2, T), lambda b, t: (b, 0, t)),
        out_shape=jax.ShapeDtypeStruct((B, 2, HW), jnp.float32),
        compiler_params=pltpu.CompilerParams(
            dimension_semantics=("parallel", "parallel")),
    )(x_flat)


# ----------------------------------------------------------------------------
# Kernel 2 (tiny, once per batch): gate = sigmoid(conv7x7 + folded BN)
# as ONE matmul against a precomputed banded matrix (shift folded as extra row).
# ----------------------------------------------------------------------------

def _gate_kernel(slab_ref, band_ref, g_ref):
    # slab_ref: (1, H, K1) pre-shifted pooled slabs (+ ones column)
    # band_ref: (K1, W)    banded conv*BN-scale matrix (+ BN-shift row)
    acc = jnp.dot(slab_ref[0], band_ref[...], preferred_element_type=jnp.float32)
    g_ref[0] = jax.nn.sigmoid(acc)                          # (H, W)


def compute_gate(slabs_aug, band_aug):
    B, H, K1 = slabs_aug.shape
    _, W = band_aug.shape
    return pl.pallas_call(
        _gate_kernel,
        grid=(B,),
        in_specs=[pl.BlockSpec((1, H, K1), lambda b: (b, 0, 0)),
                  pl.BlockSpec((K1, W), lambda b: (0, 0))],
        out_specs=pl.BlockSpec((1, H, W), lambda b: (b, 0, 0)),
        out_shape=jax.ShapeDtypeStruct((B, H, W), jnp.float32),
        compiler_params=pltpu.CompilerParams(
            dimension_semantics=("parallel",)),
    )(slabs_aug, band_aug)


# ----------------------------------------------------------------------------
# Kernel 3: lane-dense broadcast apply  out = x * gate  (pure HBM streaming)
# ----------------------------------------------------------------------------

def _apply_kernel(x_ref, g_ref, o_ref):
    # x_ref: (1, c_tile, T), g_ref: (1, 1, T) f32, o_ref: (1, c_tile, T)
    xv = x_ref[0].astype(jnp.float32)
    o_ref[0] = (xv * g_ref[0]).astype(o_ref.dtype)


def apply_gate(x_flat, gate_flat):
    B, C, HW = x_flat.shape
    dsize = x_flat.dtype.itemsize
    c_tile, T = _pick_apply_tiles(C, HW, dsize, 2 << 20)    # ~2 MiB per buffer
    return pl.pallas_call(
        _apply_kernel,
        grid=(B, C // c_tile, HW // T),
        in_specs=[pl.BlockSpec((1, c_tile, T), lambda b, ci, t: (b, ci, t)),
                  pl.BlockSpec((1, 1, T), lambda b, ci, t: (b, 0, t))],
        out_specs=pl.BlockSpec((1, c_tile, T), lambda b, ci, t: (b, ci, t)),
        out_shape=jax.ShapeDtypeStruct((B, C, HW), x_flat.dtype),
        compiler_params=pltpu.CompilerParams(
            dimension_semantics=("parallel", "parallel", "parallel")),
    )(x_flat, gate_flat)


# ----------------------------------------------------------------------------
# Wrapper: fold BN, build shifted slabs + banded matrix, call the three kernels
# ----------------------------------------------------------------------------

def _build_band_matrix(w_folded, W):
    """w_folded: (2, 7, 7). Returns (14*(W+6), W) with
    band[(c*7+dy)*(W+6) + (w+dx), w] = w_folded[c, dy, dx], zeros elsewhere."""
    rows = jnp.arange(W + 6)
    cols = jnp.arange(W)
    diff = rows[:, None] - cols[None, :]                    # == dx where valid
    valid = (diff >= 0) & (diff <= 6)
    idx = jnp.clip(diff, 0, 6)
    S = jnp.where(valid[None, None], w_folded[:, :, idx], 0.0)   # (2, 7, W+6, W)
    return S.reshape(14 * (W + 6), W).astype(jnp.float32)


@jax.jit
def spatial_gate_forward(params, x):
    """x: (B, C, H, W) NCHW.  Returns x * sigmoid(BN(conv7x7(ChannelPool(x))))."""
    B, C, H, W = x.shape
    HW = H * W
    x_flat = x.reshape(B, C, HW)

    # 1) ChannelPool (Pallas K1), lane-dense over the flattened spatial dim.
    pooled = channel_pool(x_flat)                           # (B, 2, HW) f32

    # 2) Tiny wrapper plumbing on the 2-channel pooled map only: zero-pad,
    #    pre-shift the 7 row offsets, concat along the contraction axis, and
    #    append a ones column (BN shift gets folded into the band matrix).
    p = pooled.reshape(B, 2, H, W)
    ppad = jnp.pad(p, ((0, 0), (0, 0), (3, 3), (3, 3)))     # (B, 2, H+6, W+6)
    slabs = jnp.stack([ppad[:, :, dy:dy + H, :] for dy in range(7)], axis=2)
    slabs = slabs.transpose(0, 3, 1, 2, 4).reshape(B, H, 14 * (W + 6))
    slabs_aug = jnp.concatenate(
        [slabs, jnp.ones((B, H, 1), jnp.float32)], axis=-1)  # (B, H, K1)

    # 3) Fold eval-mode BN (single output channel) into conv weight / bias.
    w_folded = (params["conv_w"] * params["bn_scale"]).astype(jnp.float32)  # (2,7,7)
    band = _build_band_matrix(w_folded, W)                   # (14*(W+6), W)
    shift_row = params["bn_shift"].astype(jnp.float32) * jnp.ones((1, W), jnp.float32)
    band_aug = jnp.concatenate([band, shift_row], axis=0)    # (K1, W)

    # 4) Gate = sigmoid(conv + BN)  (Pallas K2, once per batch, hoisted).
    gate = compute_gate(slabs_aug, band_aug)                 # (B, H, W) f32
    gate_flat = gate.reshape(B, 1, HW)

    # 5) out = x * gate  (Pallas K3, lane-dense streaming).
    out_flat = apply_gate(x_flat, gate_flat)                 # (B, C, HW)
    return out_flat.reshape(B, C, H, W)


# ----------------------------------------------------------------------------
# Synthetic parameters (eval-mode BN folded to scale/shift) and pure-JAX reference
# ----------------------------------------------------------------------------

def init_spatial_gate_params(key):
    k_w, k_g, k_b, k_m, k_v = jax.random.split(key, 5)
    conv_w = 0.1 * jax.random.normal(k_w, (2, 7, 7), jnp.float32)   # out_ch = 1 folded
    gamma = 1.0 + 0.1 * jax.random.normal(k_g, (), jnp.float32)
    beta = 0.1 * jax.random.normal(k_b, (), jnp.float32)
    r_mean = 0.1 * jax.random.normal(k_m, (), jnp.float32)
    r_var = 1.0 + 0.1 * jnp.abs(jax.random.normal(k_v, (), jnp.float32))
    eps = 1e-5
    bn_scale = gamma / jnp.sqrt(r_var + eps)
    bn_shift = beta - r_mean * bn_scale
    return {"conv_w": conv_w, "bn_scale": bn_scale, "bn_shift": bn_shift}


def spatial_gate_reference(params, x):
    x = x.astype(jnp.float32)
    mx = jnp.max(x, axis=1, keepdims=True)
    mn = jnp.mean(x, axis=1, keepdims=True)
    pooled = jnp.concatenate([mx, mn], axis=1)                    # (B, 2, H, W)
    conv = jax.lax.conv_general_dilated(
        pooled, params["conv_w"][None],                           # (1, 2, 7, 7) OIHW
        window_strides=(1, 1), padding=((3, 3), (3, 3)),
        dimension_numbers=("NCHW", "OIHW", "NCHW"))
    gate = jax.nn.sigmoid(params["bn_scale"] * conv + params["bn_shift"])
    return x * gate


# ----------------------------------------------------------------------------
# main
# ----------------------------------------------------------------------------

if __name__ == "__main__":
    B, C, H, W = 2, 8, 16, 16

    key = jax.random.PRNGKey(0)
    k_p, k_x = jax.random.split(key)
    params = init_spatial_gate_params(k_p)
    x = jax.random.normal(k_x, (B, C, H, W), jnp.float32)

    out = spatial_gate_forward(params, x)
    out = jax.block_until_ready(out)

    assert out.shape == (B, C, H, W), out.shape
    assert bool(jnp.all(jnp.isfinite(out)))

    ref = spatial_gate_reference(params, x)
    err = float(jnp.max(jnp.abs(out - ref)))
    assert err < 1e-2, f"max abs error vs reference: {err}"

    print("KERNEL_OK")
</pallas_src>

<mosaic_0001>
module attributes {stable_mosaic.version = 11 : i64} {
  func.func @_channel_pool_kernel(%arg0: i32, %arg1: i32, %arg2: memref<1x8x256xf32, #tpu.memory_space<vmem>>, %arg3: memref<1x2x256xf32, #tpu.memory_space<vmem>>) attributes {dimension_semantics = [#tpu.dimension_semantics<parallel>, #tpu.dimension_semantics<parallel>], iteration_bounds = array<i64: 2, 1>, scalar_prefetch = 0 : i64, scratch_operands = 0 : i64, tpu.core_type = #tpu.core_type<tc>, window_params = [{transform_indices = @transform_0, window_bounds = array<i64: 1, 8, 256>}, {transform_indices = @transform_1, window_bounds = array<i64: 1, 2, 256>}]} {
    %c0 = arith.constant 0 : index
    %c0_0 = arith.constant 0 : index
    %c0_1 = arith.constant 0 : index
    %0 = vector.load %arg2[%c0, %c0_0, %c0_1] : memref<1x8x256xf32, #tpu.memory_space<vmem>>, vector<1x8x256xf32>
    %1 = vector.shape_cast %0 : vector<1x8x256xf32> to vector<8x256xf32>
    %cst = arith.constant dense<0xFF800000> : vector<256xf32>
    %2 = vector.multi_reduction <maximumf>, %1, %cst [0] : vector<8x256xf32> to vector<256xf32>
    %3 = vector.shape_cast %2 : vector<256xf32> to vector<1x256xf32>
    %cst_2 = arith.constant dense<0.000000e+00> : vector<256xf32>
    %4 = vector.multi_reduction <add>, %1, %cst_2 [0] : vector<8x256xf32> to vector<256xf32>
    %5 = vector.shape_cast %4 : vector<256xf32> to vector<1x256xf32>
    %cst_3 = arith.constant 1.250000e-01 : f32
    %6 = vector.broadcast %cst_3 : f32 to vector<1x256xf32>
    %7 = arith.mulf %5, %6 : vector<1x256xf32>
    %8 = tpu.concatenate %3, %7 in 0 : vector<1x256xf32>, vector<1x256xf32> -> vector<2x256xf32>
    %c0_4 = arith.constant 0 : index
    %c0_5 = arith.constant 0 : index
    %c0_6 = arith.constant 0 : index
    %9 = vector.load %arg3[%c0_4, %c0_5, %c0_6] : memref<1x2x256xf32, #tpu.memory_space<vmem>>, vector<1x2x256xf32>
    %10 = vector.shape_cast %9 : vector<1x2x256xf32> to vector<2x256xf32>
    %11 = vector.shape_cast %8 : vector<2x256xf32> to vector<1x2x256xf32>
    tpu.vector_store %arg3[%c0_4, %c0_5, %c0_6], %11 {strides = array<i32>} : memref<1x2x256xf32, #tpu.memory_space<vmem>>, vector<1x2x256xf32>,
    return
  }
  func.func @transform_0(%arg0: i32, %arg1: i32) -> (i32, i32, i32) {
    %c0_i32 = arith.constant 0 : i32
    %c0_i32_0 = arith.constant 0 : i32
    return %arg0, %c0_i32, %arg1 : i32, i32, i32
  }
  func.func @transform_1(%arg0: i32, %arg1: i32) -> (i32, i32, i32) {
    %c0_i32 = arith.constant 0 : i32
    %c0_i32_0 = arith.constant 0 : i32
    return %arg0, %c0_i32, %arg1 : i32, i32, i32
  }
}

module attributes {stable_mosaic.version = 11 : i64} {
  func.func @_gate_kernel(%arg0: i32, %arg1: memref<1x16x309xf32, #tpu.memory_space<vmem>>, %arg2: memref<309x16xf32, #tpu.memory_space<vmem>>, %arg3: memref<1x16x16xf32, #tpu.memory_space<vmem>>) attributes {dimension_semantics = [#tpu.dimension_semantics<parallel>], iteration_bounds = array<i64: 2>, scalar_prefetch = 0 : i64, scratch_operands = 0 : i64, tpu.core_type = #tpu.core_type<tc>, window_params = [{transform_indices = @transform_0, window_bounds = array<i64: 1, 16, 309>}, {pipeline_mode = #tpu.pipeline_mode<synchronous>, transform_indices = @transform_1, window_bounds = array<i64: 309, 16>}, {transform_indices = @transform_2, window_bounds = array<i64: 1, 16, 16>}]} {
    %c0 = arith.constant 0 : index
    %c0_0 = arith.constant 0 : index
    %c0_1 = arith.constant 0 : index
    %0 = vector.load %arg1[%c0, %c0_0, %c0_1] : memref<1x16x309xf32, #tpu.memory_space<vmem>>, vector<1x16x309xf32>
    %1 = vector.shape_cast %0 : vector<1x16x309xf32> to vector<16x309xf32>
    %c0_2 = arith.constant 0 : index
    %c0_3 = arith.constant 0 : index
    %2 = vector.load %arg2[%c0_2, %c0_3] : memref<309x16xf32, #tpu.memory_space<vmem>>, vector<309x16xf32>
    %cst = arith.constant dense<0.000000e+00> : vector<16x16xf32>
    %3 = tpu.matmul %1, %2, %cst {dimension_numbers = #tpu.dot_dimension_numbers<[1], [0], [0], [1], [0, 0, 1, 1], [], []>} : vector<16x309xf32>, vector<309x16xf32>, vector<16x16xf32> -> vector<16x16xf32>
    %4 = arith.negf %3 : vector<16x16xf32>
    %5 = math.exp %4 : vector<16x16xf32>
    %cst_4 = arith.constant 1.000000e+00 : f32
    %6 = vector.broadcast %cst_4 : f32 to vector<16x16xf32>
    %7 = arith.addf %6, %5 : vector<16x16xf32>
    %8 = arith.divf %6, %7 : vector<16x16xf32>
    %c0_5 = arith.constant 0 : index
    %c0_6 = arith.constant 0 : index
    %c0_7 = arith.constant 0 : index
    %9 = vector.load %arg3[%c0_5, %c0_6, %c0_7] : memref<1x16x16xf32, #tpu.memory_space<vmem>>, vector<1x16x16xf32>
    %10 = vector.shape_cast %9 : vector<1x16x16xf32> to vector<16x16xf32>
    %11 = vector.shape_cast %8 : vector<16x16xf32> to vector<1x16x16xf32>
    tpu.vector_store %arg3[%c0_5, %c0_6, %c0_7], %11 {strides = array<i32>} : memref<1x16x16xf32, #tpu.memory_space<vmem>>, vector<1x16x16xf32>,
    return
  }
  func.func @transform_0(%arg0: i32) -> (i32, i32, i32) {
    %c0_i32 = arith.constant 0 : i32
    %c0_i32_0 = arith.constant 0 : i32
    %c0_i32_1 = arith.constant 0 : i32
    return %arg0, %c0_i32, %c0_i32_0 : i32, i32, i32
  }
  func.func @transform_1(%arg0: i32) -> (i32, i32) {
    %c0_i32 = arith.constant 0 : i32
    %c0_i32_0 = arith.constant 0 : i32
    %c0_i32_1 = arith.constant 0 : i32
    return %c0_i32, %c0_i32_0 : i32, i32
  }
  func.func @transform_2(%arg0: i32) -> (i32, i32, i32) {
    %c0_i32 = arith.constant 0 : i32
    %c0_i32_0 = arith.constant 0 : i32
    %c0_i32_1 = arith.constant 0 : i32
    return %arg0, %c0_i32, %c0_i32_0 : i32, i32, i32
  }
}

module attributes {stable_mosaic.version = 11 : i64} {
  func.func @_apply_kernel(%arg0: i32, %arg1: i32, %arg2: i32, %arg3: memref<1x8x256xf32, #tpu.memory_space<vmem>>, %arg4: memref<1x1x256xf32, #tpu.memory_space<vmem>>, %arg5: memref<1x8x256xf32, #tpu.memory_space<vmem>>) attributes {dimension_semantics = [#tpu.dimension_semantics<parallel>, #tpu.dimension_semantics<parallel>, #tpu.dimension_semantics<parallel>], iteration_bounds = array<i64: 2, 1, 1>, scalar_prefetch = 0 : i64, scratch_operands = 0 : i64, tpu.core_type = #tpu.core_type<tc>, window_params = [{transform_indices = @transform_0, window_bounds = array<i64: 1, 8, 256>}, {transform_indices = @transform_1, window_bounds = array<i64: 1, 1, 256>}, {transform_indices = @transform_2, window_bounds = array<i64: 1, 8, 256>}]} {
    %c0 = arith.constant 0 : index
    %c0_0 = arith.constant 0 : index
    %c0_1 = arith.constant 0 : index
    %0 = vector.load %arg3[%c0, %c0_0, %c0_1] : memref<1x8x256xf32, #tpu.memory_space<vmem>>, vector<1x8x256xf32>
    %1 = vector.shape_cast %0 : vector<1x8x256xf32> to vector<8x256xf32>
    %c0_2 = arith.constant 0 : index
    %c0_3 = arith.constant 0 : index
    %c0_4 = arith.constant 0 : index
    %2 = vector.load %arg4[%c0_2, %c0_3, %c0_4] : memref<1x1x256xf32, #tpu.memory_space<vmem>>, vector<1x1x256xf32>
    %3 = vector.shape_cast %2 : vector<1x1x256xf32> to vector<1x256xf32>
    %4 = vector.broadcast %3 : vector<1x256xf32> to vector<8x256xf32>
    %5 = arith.mulf %1, %4 : vector<8x256xf32>
    %c0_5 = arith.constant 0 : index
    %c0_6 = arith.constant 0 : index
    %c0_7 = arith.constant 0 : index
    %6 = vector.load %arg5[%c0_5, %c0_6, %c0_7] : memref<1x8x256xf32, #tpu.memory_space<vmem>>, vector<1x8x256xf32>
    %7 = vector.shape_cast %6 : vector<1x8x256xf32> to vector<8x256xf32>
    %8 = vector.shape_cast %5 : vector<8x256xf32> to vector<1x8x256xf32>
    tpu.vector_store %arg5[%c0_5, %c0_6, %c0_7], %8 {strides = array<i32>} : memref<1x8x256xf32, #tpu.memory_space<vmem>>, vector<1x8x256xf32>,
    return
  }
  func.func @transform_0(%arg0: i32, %arg1: i32, %arg2: i32) -> (i32, i32, i32) {
    %c0_i32 = arith.constant 0 : i32
    return %arg0, %arg1, %arg2 : i32, i32, i32
  }
  func.func @transform_1(%arg0: i32, %arg1: i32, %arg2: i32) -> (i32, i32, i32) {
    %c0_i32 = arith.constant 0 : i32
    %c0_i32_0 = arith.constant 0 : i32
    return %arg0, %c0_i32, %arg2 : i32, i32, i32
  }
  func.func @transform_2(%arg0: i32, %arg1: i32, %arg2: i32) -> (i32, i32, i32) {
    %c0_i32 = arith.constant 0 : i32
    return %arg0, %arg1, %arg2 : i32, i32, i32
  }
}

</mosaic_0001>

<llo_original>
// kernel: spatial_gate_forward.3
$region0: #{spatial_gate_forward.3}
  #allocation0 [shape = 'u32[]', space=smem, size = 0x4, offset = 0x4, fixed_abs, tag = 'smem constant byte address 0x4 - core index']
  #allocation1 [shape = 'u32[72,128]{1,0:T(1,128)}', space=vmem, size = 0x9000, scoped, tag = 'internal scratch']
  %s0 = inlined_call_operand.vmem [shape: f32[2,8,256], index: 0, kind: input, shape index: {}]
  %s1 = inlined_call_operand.vmem [shape: f32[2,2,256], index: 1, kind: output, shape index: {}]
  %s2 = sld [smem:[#allocation0]]
  $region37: #{spatial_gate_forward.3} parent=0
    _
  %s4 = ssub.s32 1, %s2
  %s5 = scalar_select 0, %s4, %s2
  loop: start=0, step=1, limit=4
  $region2: #{spatial_gate_forward.3} parent=0 // loop_pre_header
    _
  $region3: #{spatial_gate_forward.3} parent=0 // loop_header
    %s7 = sphi 0, %s11
    %p8 = scmp.ge.s32.totalorder %s7, 4
    %s14 = sphi 0, %s26
    %s15 = sphi 0, %s22
    %s16 = sphi 0, %s14
    %s17 = sphi 0, %s15
    %s18 = sphi 0, %s16
    %s19 = sphi 0, %s17
    %s31 = sphi 0, %s33
    %s34 = sphi 0, %s31
    %s35 = sphi 0, %s34
    %s51 = sphi 0, %s35
    %s59 = sphi 0, %s61
    %s62 = sphi 0, %s59
    %s63 = sphi 0, %s62
    %s79 = sphi 0, %s63
  $region4: #{spatial_gate_forward.3} parent=0 // loop_header_branch
    %10 = sbr.rel (%p8) target = $region8
  $region5: #{spatial_gate_forward.3} parent=0 // loop_body
    %s12 = ssub.s32 %s7, 1
    %s13 = ssub.s32 %s7, 2
    %s20 = sadd.s32 1, %s15
    %p21 = scmp.ge.s32.totalorder %s20, 1
    %s22 = scalar_select %p21, 0, %s20
    %s23 = sadd.s32 1, %s14
    %s24 = scalar_select %p21, %s23, %s14
    %p25 = scmp.ge.s32.totalorder %s24, 2
    %s26 = scalar_select %p25, 0, %s24
    %s27 = ssub.s32 %s14, %s26
    %s28 = ssub.s32 %s15, %s22
    %s29 = sor.u32 %s27, %s28
    %p30 = scmp.eq.s32.totalorder %s29, 0
    %s32 = sadd.s32 %s31, 1
    %s33 = scalar_select %p30, %s31, %s32
    %p36 = pneg %p30
    %p37 = scmp.eq.s32.totalorder %s7, 1
    %p38 = por %p36, %p37
    %p39 = scmp.ne.s32.totalorder %s31, %s34
    %p40 = scmp.eq.s32.totalorder %s7, 0
    %p41 = por %p39, %p40
    %p42 = scmp.ne.s32.totalorder %s31, %s34
    %p43 = scmp.eq.s32.totalorder %s12, 1
    %p44 = por %p42, %p43
    %p45 = scmp.ne.s32.totalorder %s34, %s35
    %p46 = scmp.eq.s32.totalorder %s12, 0
    %p47 = por %p45, %p46
    %p48 = scmp.ne.s32.totalorder %s34, %s35
    %p49 = scmp.eq.s32.totalorder %s13, 1
    %p50 = por %p48, %p49
    %p52 = scmp.ne.s32.totalorder %s35, %s51
    %p53 = scmp.eq.s32.totalorder %s13, 0
    %p54 = por %p52, %p53
    %s55 = ssub.s32 %s14, %s26
    %s56 = ssub.s32 %s15, %s22
    %s57 = sor.u32 %s55, %s56
    %p58 = scmp.eq.s32.totalorder %s57, 0
    %s60 = sadd.s32 %s59, 1
    %s61 = scalar_select %p58, %s59, %s60
    %p64 = pneg %p58
    %p65 = scmp.eq.s32.totalorder %s7, 1
    %p66 = por %p64, %p65
    %p67 = scmp.ne.s32.totalorder %s59, %s62
    %p68 = scmp.eq.s32.totalorder %s7, 0
    %p69 = por %p67, %p68
    %p70 = scmp.ne.s32.totalorder %s59, %s62
    %p71 = scmp.eq.s32.totalorder %s12, 1
    %p72 = por %p70, %p71
    %p73 = scmp.ne.s32.totalorder %s62, %s63
    %p74 = scmp.eq.s32.totalorder %s12, 0
    %p75 = por %p73, %p74
    %p76 = scmp.ne.s32.totalorder %s62, %s63
    %p77 = scmp.eq.s32.totalorder %s13, 1
    %p78 = por %p76, %p77
    %p80 = scmp.ne.s32.totalorder %s63, %s79
    %p81 = scmp.eq.s32.totalorder %s13, 0
    %p82 = por %p80, %p81
    %p83 = scmp.le.s32.totalorder 1, %s7
    %p84 = scmp.lt.s32.totalorder %s7, 3
    %p85 = pnand %p83, %p84
    %p86 = pneg %p85
    // Predicated region
    $region9: #{spatial_gate_forward.3} parent=5 // pred_check
      _
    $region10: #{spatial_gate_forward.3} parent=5 // pred_check_branch
      %88 = sbr.rel (%p85) target = $region12
    $region11: #{spatial_gate_forward.3} parent=5 // pred_region
      %s89 = ssub.s32 %s7, 1
    $region12: #{spatial_gate_forward.3} parent=5 // pred_fallthru
      _
    %p90 = scmp.lt.s32.totalorder %s7, 2
    // Predicated region
    $region13: #{spatial_gate_forward.3} parent=5 // pred_check
      %p91 = pneg %p90
    $region14: #{spatial_gate_forward.3} parent=5 // pred_check_branch
      %93 = sbr.rel (%p91) target = $region16
    $region15: #{spatial_gate_forward.3} parent=5 // pred_region
      // Predicated region
      $region17: #{spatial_gate_forward.3} parent=15 // pred_check
        %p94 = pneg %p41
      $region18: #{spatial_gate_forward.3} parent=15 // pred_check_branch
        %96 = sbr.rel (%p94) target = $region20
      $region19: #{spatial_gate_forward.3} parent=15 // pred_region
        %s97 = smul.u32 2, %s15
        %p98 = scmp.lt.s32.totalorder %s14, 1
        %s99 = scalar_select %p98, %s14, 1
        %p100 = scmp.lt.s32.totalorder %s97, 1
        %s101 = scalar_select %p100, %s97, 1
        %s102 = smul.addr %s99, 2
        %s103 = sadd.s32 %s101, %s102
        %s104 = smul.addr %s103, 8
        %s105 = scalar_lea.vmem %s0, %s104
        %s106 = smul.u32 2, %s15
      $region20: #{spatial_gate_forward.3} parent=15 // pred_fallthru
        _
    $region16: #{spatial_gate_forward.3} parent=5 // pred_fallthru
      _
    %p107 = scmp.le.s32.totalorder 1, %s7
    %p108 = scmp.lt.s32.totalorder %s7, 3
    %p109 = pnand %p107, %p108
    %p110 = pneg %p109
    // Predicated region
    $region21: #{spatial_gate_forward.3} parent=5 // pred_check
      _
    $region22: #{spatial_gate_forward.3} parent=5 // pred_check_branch
      %112 = sbr.rel (%p109) target = $region24
    $region23: #{spatial_gate_forward.3} parent=5 // pred_region
      %s113 = ssub.s32 %s7, 1
      %s114 = smul.u32 2, %s17
      %p115 = scmp.lt.s32.totalorder %s16, 1
      %s116 = scalar_select %p115, %s16, 1
      %p117 = scmp.lt.s32.totalorder %s114, 1
      %s118 = scalar_select %p117, %s114, 1
      %s119 = smul.addr %s116, 2
      %s120 = sadd.s32 %s118, %s119
      %s121 = smul.addr %s120, 8
      %s122 = scalar_lea.vmem %s0, %s121
      %p123 = pneg %p47
      %p124 = pneg %p44
      %p125 = pneg %p75
      %p126 = pneg %p72
      %s127 = smul.u32 2, %s17
      %p128 = scmp.lt.s32.totalorder %s16, 1
      %s129 = scalar_select %p128, %s16, 1
      %p130 = scmp.lt.s32.totalorder %s127, 1
      %s131 = scalar_select %p130, %s127, 1
      %s132 = smul.addr %s129, 2
      %s133 = sadd.s32 %s131, %s132
      %s134 = smul.addr %s133, 2
      %s135 = scalar_lea.vmem %s1, %s134
      %s136 = smul.u32 2, %s17
      %p137 = scmp.lt.s32.totalorder %s16, 1
      %s138 = scalar_select %p137, %s16, 1
      %p139 = scmp.lt.s32.totalorder %s136, 1
      %s140 = scalar_select %p139, %s136, 1
      %s141 = smul.addr %s138, 2
      %s142 = sadd.s32 %s140, %s141
      %s143 = smul.addr %s142, 8
      %s144 = scalar_lea.vmem %s0, %s143
      %s145 = smul.u32 2, %s17
      %s146 = smul.u32 2, %s17
      %p147 = scmp.lt.s32.totalorder %s16, 1
      %s148 = scalar_select %p147, %s16, 1
      %p149 = scmp.lt.s32.totalorder %s146, 1
      %s150 = scalar_select %p149, %s146, 1
      %s151 = smul.addr %s148, 2
      %s152 = sadd.s32 %s150, %s151
      %s153 = smul.addr %s152, 2
      %s154 = scalar_lea.vmem %s1, %s153
      %s155 = smul.u32 2, %s17
      %v156 = vld [vmem:[%s144] sm:$0xff]
      %v157 = vld [vmem:[%s144 + $0x8] sm:$0xff]
      %v158 = vrot.slane %v156, 4
      %v159 = vmax.f32 %v156, %v158
      %v160 = vrot.slane %v159, 2
      %v161 = vmax.f32 %v159, %v160
      %v162 = vrot.slane %v161, 1
      %v163 = vmax.f32 %v161, %v162
      %v164 = vrot.slane %v157, 4
      %v165 = vmax.f32 %v157, %v164
      %v166 = vrot.slane %v165, 2
      %v167 = vmax.f32 %v165, %v166
      %v168 = vrot.slane %v167, 1
      %v169 = vmax.f32 %v167, %v168
      %v170 = vrot.slane %v156, 4
      %v171 = vadd.f32 %v156, %v170
      %v172 = vrot.slane %v171, 2
      %v173 = vadd.f32 %v171, %v172
      %v174 = vrot.slane %v173, 1
      %v175 = vadd.f32 %v173, %v174
      %v176 = vrot.slane %v157, 4
      %v177 = vadd.f32 %v157, %v176
      %v178 = vrot.slane %v177, 2
      %v179 = vadd.f32 %v177, %v178
      %v180 = vrot.slane %v179, 1
      %v181 = vadd.f32 %v179, %v180
      %v182 = vmul.f32 %v175, 0.125
      %v183 = vmul.f32 %v181, 0.125
      %vm184 = vcmask 1040384
      %v185 = vsel %vm184, %v163, %v182
      %v186 = vsel %vm184, %v169, %v183
      %v189 = vrot.slane %v186, 6
      %vm190 = vcmask 1041408
      %v191 = vsel %vm190, %v185, %v189
      %193 = vst [vmem:[%s154] sm:$0xf] %v191
      %s194 = smul.u32 2, %s17
      %p195 = scmp.lt.s32.totalorder %s16, 1
      %s196 = scalar_select %p195, %s16, 1
      %p197 = scmp.lt.s32.totalorder %s194, 1
      %s198 = scalar_select %p197, %s194, 1
      %s199 = smul.addr %s196, 2
      %s200 = sadd.s32 %s198, %s199
      %s201 = smul.addr %s200, 2
      %s202 = scalar_lea.vmem %s1, %s201
      // Predicated region
      $region25: #{spatial_gate_forward.3} parent=23 // pred_check
        %p203 = pneg %p72
      $region26: #{spatial_gate_forward.3} parent=23 // pred_check_branch
        %205 = sbr.rel (%p203) target = $region28
      $region27: #{spatial_gate_forward.3} parent=23 // pred_region
        %s206 = smul.u32 2, %s17
      $region28: #{spatial_gate_forward.3} parent=23 // pred_fallthru
        _
    $region24: #{spatial_gate_forward.3} parent=5 // pred_fallthru
      _
    %p207 = scmp.le.s32.totalorder 2, %s7
    // Predicated region
    $region29: #{spatial_gate_forward.3} parent=5 // pred_check
      %p208 = pneg %p207
    $region30: #{spatial_gate_forward.3} parent=5 // pred_check_branch
      %210 = sbr.rel (%p208) target = $region32
    $region31: #{spatial_gate_forward.3} parent=5 // pred_region
      %s211 = ssub.s32 %s7, 2
      // Predicated region
      $region33: #{spatial_gate_forward.3} parent=31 // pred_check
        %p212 = pneg %p78
      $region34: #{spatial_gate_forward.3} parent=31 // pred_check_branch
        %214 = sbr.rel (%p212) target = $region36
      $region35: #{spatial_gate_forward.3} parent=31 // pred_region
        %s215 = smul.u32 2, %s19
        %p216 = scmp.lt.s32.totalorder %s18, 1
        %s217 = scalar_select %p216, %s18, 1
        %p218 = scmp.lt.s32.totalorder %s215, 1
        %s219 = scalar_select %p218, %s215, 1
        %s220 = smul.addr %s217, 2
        %s221 = sadd.s32 %s219, %s220
        %s222 = smul.addr %s221, 2
        %s223 = scalar_lea.vmem %s1, %s222
      $region36: #{spatial_gate_forward.3} parent=31 // pred_fallthru
        _
    $region32: #{spatial_gate_forward.3} parent=5 // pred_fallthru
      _
  $region6: #{spatial_gate_forward.3} parent=0 // loop_footer
    %s11 = sadd.s32 1, %s7
  $region7: #{spatial_gate_forward.3} parent=0 // loop_footer_branch
    %6 = sbr.rel target = $region3
  $region8: #{spatial_gate_forward.3} parent=0 // loop_exit
    _

// kernel: spatial_gate_forward.4
$region0: #{spatial_gate_forward.4}
  #allocation0 [shape = 'u32[]', space=smem, size = 0x4, offset = 0x4, fixed_abs, tag = 'smem constant byte address 0x4 - core index']
  #allocation1 [shape = 'u32[72,128]{1,0:T(1,128)}', space=vmem, size = 0x9000, scoped, tag = 'internal scratch']
  %s0 = inlined_call_operand.vmem [shape: f32[2,16,309], index: 0, kind: input, shape index: {}]
  %s1 = inlined_call_operand.vmem [shape: f32[309,16], index: 1, kind: input, shape index: {}]
  %s2 = inlined_call_operand.vmem [shape: f32[2,16,16], index: 2, kind: output, shape index: {}]
  %s3 = sld [smem:[#allocation0]]
  $region41: #{spatial_gate_forward.4} parent=0
    _
  %s5 = ssub.s32 1, %s3
  %s6 = scalar_select 0, %s5, %s3
  loop: start=0, step=1, limit=4
  $region2: #{spatial_gate_forward.4} parent=0 // loop_pre_header
    _
  $region3: #{spatial_gate_forward.4} parent=0 // loop_header
    %s8 = sphi 0, %s12
    %p9 = scmp.ge.s32.totalorder %s8, 4
    %s18 = sphi 0, %s20
    %s21 = sphi 0, %s18
    %s22 = sphi 0, %s21
    %s38 = sphi 0, %s22
    %s42 = sphi 0, %s42
    %s44 = sphi 0, %s42
    %s45 = sphi 0, %s44
    %s59 = sphi 0, %s45
    %s65 = sphi 0, %s67
    %s68 = sphi 0, %s65
    %s69 = sphi 0, %s68
    %s85 = sphi 0, %s69
  $region4: #{spatial_gate_forward.4} parent=0 // loop_header_branch
    %11 = sbr.rel (%p9) target = $region8
  $region5: #{spatial_gate_forward.4} parent=0 // loop_body
    %s13 = ssub.s32 %s8, 1
    %s14 = ssub.s32 %s8, 2
    %s15 = sadd.s32 %s8, 1
    %s16 = ssub.s32 %s8, %s15
    %p17 = scmp.eq.s32.totalorder %s16, 0
    %s19 = sadd.s32 %s18, 1
    %s20 = scalar_select %p17, %s18, %s19
    %p23 = pneg %p17
    %p24 = scmp.eq.s32.totalorder %s8, 1
    %p25 = por %p23, %p24
    %p26 = scmp.ne.s32.totalorder %s18, %s21
    %p27 = scmp.eq.s32.totalorder %s8, 0
    %p28 = por %p26, %p27
    %p29 = scmp.ne.s32.totalorder %s18, %s21
    %p30 = scmp.eq.s32.totalorder %s13, 1
    %p31 = por %p29, %p30
    %p32 = scmp.ne.s32.totalorder %s21, %s22
    %p33 = scmp.eq.s32.totalorder %s13, 0
    %p34 = por %p32, %p33
    %p35 = scmp.ne.s32.totalorder %s21, %s22
    %p36 = scmp.eq.s32.totalorder %s14, 1
    %p37 = por %p35, %p36
    %p39 = scmp.ne.s32.totalorder %s22, %s38
    %p40 = scmp.eq.s32.totalorder %s14, 0
    %p41 = por %p39, %p40
    %s43 = sadd.s32 %s42, 1
    %p46 = scmp.eq.s32.totalorder %s8, 1
    %p47 = scmp.ne.s32.totalorder %s42, %s44
    %p48 = scmp.eq.s32.totalorder %s8, 0
    %p49 = por %p47, %p48
    %p50 = scmp.ne.s32.totalorder %s42, %s44
    %p51 = scmp.eq.s32.totalorder %s13, 1
    %p52 = por %p50, %p51
    %p53 = scmp.ne.s32.totalorder %s44, %s45
    %p54 = scmp.eq.s32.totalorder %s13, 0
    %p55 = por %p53, %p54
    %p56 = scmp.ne.s32.totalorder %s44, %s45
    %p57 = scmp.eq.s32.totalorder %s14, 1
    %p58 = por %p56, %p57
    %p60 = scmp.ne.s32.totalorder %s45, %s59
    %p61 = scmp.eq.s32.totalorder %s14, 0
    %p62 = por %p60, %p61
    %s63 = ssub.s32 %s8, %s15
    %p64 = scmp.eq.s32.totalorder %s63, 0
    %s66 = sadd.s32 %s65, 1
    %s67 = scalar_select %p64, %s65, %s66
    %p70 = pneg %p64
    %p71 = scmp.eq.s32.totalorder %s8, 1
    %p72 = por %p70, %p71
    %p73 = scmp.ne.s32.totalorder %s65, %s68
    %p74 = scmp.eq.s32.totalorder %s8, 0
    %p75 = por %p73, %p74
    %p76 = scmp.ne.s32.totalorder %s65, %s68
    %p77 = scmp.eq.s32.totalorder %s13, 1
    %p78 = por %p76, %p77
    %p79 = scmp.ne.s32.totalorder %s68, %s69
    %p80 = scmp.eq.s32.totalorder %s13, 0
    %p81 = por %p79, %p80
    %p82 = scmp.ne.s32.totalorder %s68, %s69
    %p83 = scmp.eq.s32.totalorder %s14, 1
    %p84 = por %p82, %p83
    %p86 = scmp.ne.s32.totalorder %s69, %s85
    %p87 = scmp.eq.s32.totalorder %s14, 0
    %p88 = por %p86, %p87
    %p89 = scmp.le.s32.totalorder 1, %s8
    %p90 = scmp.lt.s32.totalorder %s8, 3
    %p91 = pnand %p89, %p90
    %p92 = pneg %p91
    // Predicated region
    $region9: #{spatial_gate_forward.4} parent=5 // pred_check
      _
    $region10: #{spatial_gate_forward.4} parent=5 // pred_check_branch
      %94 = sbr.rel (%p91) target = $region12
    $region11: #{spatial_gate_forward.4} parent=5 // pred_region
      %s95 = ssub.s32 %s8, 1
      // Predicated region
      $region13: #{spatial_gate_forward.4} parent=11 // pred_check
        %p96 = pneg %p55
      $region14: #{spatial_gate_forward.4} parent=11 // pred_check_branch
        %98 = sbr.rel (%p96) target = $region16
      $region15: #{spatial_gate_forward.4} parent=11 // pred_region
        _
      $region16: #{spatial_gate_forward.4} parent=11 // pred_fallthru
        _
    $region12: #{spatial_gate_forward.4} parent=5 // pred_fallthru
      _
    %p99 = scmp.lt.s32.totalorder %s8, 2
    // Predicated region
    $region17: #{spatial_gate_forward.4} parent=5 // pred_check
      %p100 = pneg %p99
    $region18: #{spatial_gate_forward.4} parent=5 // pred_check_branch
      %102 = sbr.rel (%p100) target = $region20
    $region19: #{spatial_gate_forward.4} parent=5 // pred_region
      // Predicated region
      $region21: #{spatial_gate_forward.4} parent=19 // pred_check
        %p103 = pneg %p28
      $region22: #{spatial_gate_forward.4} parent=19 // pred_check_branch
        %105 = sbr.rel (%p103) target = $region24
      $region23: #{spatial_gate_forward.4} parent=19 // pred_region
        %p106 = scmp.lt.s32.totalorder %s8, 1
        %s107 = scalar_select %p106, %s8, 1
        %s108 = smul.addr %s107, 6
        %s109 = smul.addr %s108, 8
        %s110 = scalar_lea.vmem %s0, %s109
      $region24: #{spatial_gate_forward.4} parent=19 // pred_fallthru
        _
    $region20: #{spatial_gate_forward.4} parent=5 // pred_fallthru
      _
    %p111 = scmp.le.s32.totalorder 1, %s8
    %p112 = scmp.lt.s32.totalorder %s8, 3
    %p113 = pnand %p111, %p112
    %p114 = pneg %p113
    // Predicated region
    $region25: #{spatial_gate_forward.4} parent=5 // pred_check
      _
    $region26: #{spatial_gate_forward.4} parent=5 // pred_check_branch
      %116 = sbr.rel (%p113) target = $region28
    $region27: #{spatial_gate_forward.4} parent=5 // pred_region
      %s117 = ssub.s32 %s8, 1
      %p118 = scmp.lt.s32.totalorder %s13, 1
      %s119 = scalar_select %p118, %s13, 1
      %s120 = smul.addr %s119, 6
      %s121 = smul.addr %s120, 8
      %s122 = scalar_lea.vmem %s0, %s121
      %p123 = pneg %p34
      %p124 = pneg %p31
      %p125 = pneg %p55
      %p126 = pneg %p52
      %p127 = pneg %p81
      %p128 = pneg %p78
      %p129 = scmp.lt.s32.totalorder %s13, 1
      %s130 = scalar_select %p129, %s13, 1
      %s131 = smul.addr %s130, 2
      %s132 = smul.addr %s131, 8
      %s133 = scalar_lea.vmem %s2, %s132
      %p134 = scmp.lt.s32.totalorder %s13, 1
      %s135 = scalar_select %p134, %s13, 1
      %s136 = smul.addr %s135, 6
      %s137 = smul.addr %s136, 8
      %s138 = scalar_lea.vmem %s0, %s137
      %p139 = scmp.lt.s32.totalorder %s13, 1
      %s140 = scalar_select %p139, %s13, 1
      %s141 = smul.addr %s140, 2
      %s142 = smul.addr %s141, 8
      %s143 = scalar_lea.vmem %s2, %s142
      %v144 = vld [vmem:[%s138] sm:$0xff]
      %v145 = vld [vmem:[%s138 + $0x8] sm:$0xff]
      %v146 = vld [vmem:[%s138 + $0x10] sm:$0xff]
      %v147 = vld [vmem:[%s138 + $0x18] sm:$0xff]
      %v148 = vld [vmem:[%s138 + $0x20] sm:$0xff]
      %v149 = vld [vmem:[%s138 + $0x28] sm:$0xff]
      %v150 = vld [vmem:[%s1] sm:$0xff]
      %v151 = vld [vmem:[%s1 + $0x8] sm:$0xff]
      %v152 = vld [vmem:[%s1 + $0x10] sm:$0xff]
      %v153 = vld [vmem:[%s1 + $0x18] sm:$0xff]
      %v154 = vld [vmem:[%s1 + $0x20] sm:$0xff]
      %v155 = vld [vmem:[%s1 + $0x28] sm:$0xff]
      %v156 = vld [vmem:[%s1 + $0x30] sm:$0xff]
      %v157 = vld [vmem:[%s1 + $0x38] sm:$0xff]
      %v158 = vld [vmem:[%s1 + $0x40] sm:$0xff]
      %v159 = vld [vmem:[%s1 + $0x48] sm:$0xff]
      %v160 = vld [vmem:[%s1 + $0x50] sm:$0xff]
      %v161 = vld [vmem:[%s1 + $0x58] sm:$0xff]
      %v162 = vld [vmem:[%s1 + $0x60] sm:$0xff]
      %v163 = vld [vmem:[%s1 + $0x68] sm:$0xff]
      %v164 = vld [vmem:[%s1 + $0x70] sm:$0xff]
      %v165 = vld [vmem:[%s1 + $0x78] sm:$0xff]
      %v166 = vld [vmem:[%s1 + $0x80] sm:$0xff]
      %v167 = vld [vmem:[%s1 + $0x88] sm:$0xff]
      %v168 = vld [vmem:[%s1 + $0x90] sm:$0xff]
      %v169 = vld [vmem:[%s1 + $0x98] sm:$0xff]
      %v170 = vld [vmem:[%s1 + $0xa0] sm:$0xff]
      %v171 = vld [vmem:[%s1 + $0xa8] sm:$0xff]
      %v172 = vld [vmem:[%s1 + $0xb0] sm:$0xff]
      %v173 = vld [vmem:[%s1 + $0xb8] sm:$0xff]
      %v174 = vld [vmem:[%s1 + $0xc0] sm:$0xff]
      %v175 = vld [vmem:[%s1 + $0xc8] sm:$0xff]
      %v176 = vld [vmem:[%s1 + $0xd0] sm:$0xff]
      %v177 = vld [vmem:[%s1 + $0xd8] sm:$0xff]
      %v178 = vld [vmem:[%s1 + $0xe0] sm:$0xff]
      %v179 = vld [vmem:[%s1 + $0xe8] sm:$0xff]
      %v180 = vld [vmem:[%s1 + $0xf0] sm:$0xff]
      %v181 = vld [vmem:[%s1 + $0xf8] sm:$0xff]
      %v182 = vld [vmem:[%s1 + $0x100] sm:$0xff]
      %v183 = vld [vmem:[%s1 + $0x108] sm:$0xff]
      %v184 = vld [vmem:[%s1 + $0x110] sm:$0xff]
      %v185 = vld [vmem:[%s1 + $0x118] sm:$0xff]
      %v186 = vld [vmem:[%s1 + $0x120] sm:$0xff]
      %v187 = vld [vmem:[%s1 + $0x128] sm:$0xff]
      %v188 = vld [vmem:[%s1 + $0x130] sm:$0x1f]
      %vm189 = vcmask 433152
      %v191 = vsel %vm189, %v146, 0
      %v194 = vsel %vm189, %v149, 0
      %vm196 = vcmask 1044480
      %v198 = vsel %vm196, %v188, 0
      %200 = vmatpush.msra.mxu0 %v165
      %201 = vmatpush.msra.mxu0 %v164
      %202 = vmatpush.msra.mxu0 %v163
      %203 = vmatpush.msra.mxu0 %v162
      %204 = vmatpush.msra.mxu0 %v161
      %205 = vmatpush.msra.mxu0 %v160
      %206 = vmatpush.msra.mxu0 %v159
      %207 = vmatpush.msra.mxu0 %v158
      %208 = vmatpush.msra.mxu0 %v157
      %209 = vmatpush.msra.mxu0 %v156
      %210 = vmatpush.msra.mxu0 %v155
      %211 = vmatpush.msra.mxu0 %v154
      %212 = vmatpush.msra.mxu0 %v153
      %213 = vmatpush.msra.mxu0 %v152
      %214 = vmatpush.msra.mxu0 %v151
      %215 = vmatpush.msra.mxu0 %v150
      %216 = vmatmul.f32.gmra.mxu0 %v144
      %v217 = vpop.f32.mrf.mxu0
      %v218 = vadd.f32 0.0, %v217
      %219 = vmatmul.f32.gmra.mxu0 %v147
      %v220 = vpop.f32.mrf.mxu0
      %v221 = vadd.f32 0.0, %v220
      %222 = vdwg.mxu0
      %223 = vmatpush.msra.mxu0 %v181
      %224 = vmatpush.msra.mxu0 %v180
      %225 = vmatpush.msra.mxu0 %v179
      %226 = vmatpush.msra.mxu0 %v178
      %227 = vmatpush.msra.mxu0 %v177
      %228 = vmatpush.msra.mxu0 %v176
      %229 = vmatpush.msra.mxu0 %v175
      %230 = vmatpush.msra.mxu0 %v174
      %231 = vmatpush.msra.mxu0 %v173
      %232 = vmatpush.msra.mxu0 %v172
      %233 = vmatpush.msra.mxu0 %v171
      %234 = vmatpush.msra.mxu0 %v170
      %235 = vmatpush.msra.mxu0 %v169
      %236 = vmatpush.msra.mxu0 %v168
      %237 = vmatpush.msra.mxu0 %v167
      %238 = vmatpush.msra.mxu0 %v166
      %239 = vmatmul.f32.gmra.mxu0 %v145
      %v240 = vpop.f32.mrf.mxu0
      %v241 = vadd.f32 %v218, %v240
      %242 = vmatmul.f32.gmra.mxu0 %v148
      %v243 = vpop.f32.mrf.mxu0
      %v244 = vadd.f32 %v221, %v243
      %245 = vdwg.mxu0
      %246 = vmatpush.msra.mxu0 0.0
      %247 = vmatpush.msra.mxu0 0.0
      %248 = vmatpush.msra.mxu0 0.0
      %249 = vmatpush.msra.mxu0 0.0
      %250 = vmatpush.msra.mxu0 0.0
      %251 = vmatpush.msra.mxu0 0.0
      %252 = vmatpush.msra.mxu0 0.0
      %253 = vmatpush.msra.mxu0 0.0
      %254 = vmatpush.msra.mxu0 0.0
      %255 = vmatpush.msra.mxu0 %v198
      %256 = vmatpush.msra.mxu0 %v187
      %257 = vmatpush.msra.mxu0 %v186
      %258 = vmatpush.msra.mxu0 %v185
      %259 = vmatpush.msra.mxu0 %v184
      %260 = vmatpush.msra.mxu0 %v183
      %261 = vmatpush.msra.mxu0 %v182
      %262 = vmatmul.f32.gmra.mxu0 %v191
      %v263 = vpop.f32.mrf.mxu0
      %v264 = vadd.f32 %v241, %v263
      %265 = vmatmul.f32.gmra.mxu0 %v194
      %v266 = vpop.f32.mrf.mxu0
      %v267 = vadd.f32 %v244, %v266
      %268 = vdwg.mxu0
      %v269 = vxor.u32 %v264, 2147483648
      %v270 = vxor.u32 %v267, 2147483648
      %v271 = vmul.f32 %v269, 1.442695
      %v272 = vpow.pop %v271
      %v273 = vmul.f32 %v270, 1.442695
      %v274 = vpow.pop %v273
      %v275 = vadd.f32 %v272, 1.0
      %v276 = vadd.f32 %v274, 1.0
      %v277 = vrcp.pop %v275
      %v278 = vmul.f32 %v275, %v277
      %v279 = vsub.f32 1.0, %v278
      %v280 = vmul.f32 %v277, %v279
      %v281 = vadd.f32 %v277, %v280
      %vm282 = vweird.f32 %v275
      %vm283 = vweird.f32 %v277
      %vm284 = vmor %vm282, %vm283
      %v285 = vsel %vm284, %v277, %v281
      %v286 = vand.u32 2147483647, %v275
      %vm287 = vcmp.eq.f32.partialorder %v286, 8.507059e+37
      %v288 = vand.u32 %v275, 2147483648
      %v289 = vor.u32 1.1754944e-38, %v288
      %v290 = vsel %vm287, %v289, %v285
      %v291 = vmul.f32 1.0, %v290
      %v292 = vrcp.pop %v276
      %v293 = vmul.f32 %v276, %v292
      %v294 = vsub.f32 1.0, %v293
      %v295 = vmul.f32 %v292, %v294
      %v296 = vadd.f32 %v292, %v295
      %vm297 = vweird.f32 %v276
      %vm298 = vweird.f32 %v292
      %vm299 = vmor %vm297, %vm298
      %v300 = vsel %vm299, %v292, %v296
      %v301 = vand.u32 2147483647, %v276
      %vm302 = vcmp.eq.f32.partialorder %v301, 8.507059e+37
      %v303 = vand.u32 %v276, 2147483648
      %v304 = vor.u32 1.1754944e-38, %v303
      %v305 = vsel %vm302, %v304, %v300
      %v306 = vmul.f32 1.0, %v305
      %vm307 = vcmask 130048
      %308 = vst.msk [vmem:[%s143] sm:$0xff] %vm307, %v291
      %309 = vst.msk [vmem:[%s143 + $0x8] sm:$0xff] %vm307, %v306
      %p310 = scmp.lt.s32.totalorder %s13, 1
      %s311 = scalar_select %p310, %s13, 1
      %s312 = smul.addr %s311, 2
      %s313 = smul.addr %s312, 8
      %s314 = scalar_lea.vmem %s2, %s313
      // Predicated region
      $region29: #{spatial_gate_forward.4} parent=27 // pred_check
        %p315 = pneg %p78
      $region30: #{spatial_gate_forward.4} parent=27 // pred_check_branch
        %317 = sbr.rel (%p315) target = $region32
      $region31: #{spatial_gate_forward.4} parent=27 // pred_region
        _
      $region32: #{spatial_gate_forward.4} parent=27 // pred_fallthru
        _
    $region28: #{spatial_gate_forward.4} parent=5 // pred_fallthru
      _
    %p318 = scmp.le.s32.totalorder 2, %s8
    // Predicated region
    $region33: #{spatial_gate_forward.4} parent=5 // pred_check
      %p319 = pneg %p318
    $region34: #{spatial_gate_forward.4} parent=5 // pred_check_branch
      %321 = sbr.rel (%p319) target = $region36
    $region35: #{spatial_gate_forward.4} parent=5 // pred_region
      %s322 = ssub.s32 %s8, 2
      // Predicated region
      $region37: #{spatial_gate_forward.4} parent=35 // pred_check
        %p323 = pneg %p84
      $region38: #{spatial_gate_forward.4} parent=35 // pred_check_branch
        %325 = sbr.rel (%p323) target = $region40
      $region39: #{spatial_gate_forward.4} parent=35 // pred_region
        %p326 = scmp.lt.s32.totalorder %s14, 1
        %s327 = scalar_select %p326, %s14, 1
        %s328 = smul.addr %s327, 2
        %s329 = smul.addr %s328, 8
        %s330 = scalar_lea.vmem %s2, %s329
      $region40: #{spatial_gate_forward.4} parent=35 // pred_fallthru
        _
    $region36: #{spatial_gate_forward.4} parent=5 // pred_fallthru
      _
  $region6: #{spatial_gate_forward.4} parent=0 // loop_footer
    %s12 = sadd.s32 1, %s8
  $region7: #{spatial_gate_forward.4} parent=0 // loop_footer_branch
    %7 = sbr.rel target = $region3
  $region8: #{spatial_gate_forward.4} parent=0 // loop_exit
    _

// kernel: spatial_gate_forward.5
$region0: #{spatial_gate_forward.5}
  #allocation0 [shape = 'u32[]', space=smem, size = 0x4, offset = 0x4, fixed_abs, tag = 'smem constant byte address 0x4 - core index']
  #allocation1 [shape = 'u32[72,128]{1,0:T(1,128)}', space=vmem, size = 0x9000, scoped, tag = 'internal scratch']
  %s0 = inlined_call_operand.vmem [shape: f32[2,8,256], index: 0, kind: input, shape index: {}]
  %s1 = inlined_call_operand.vmem [shape: f32[2,1,256], index: 1, kind: input, shape index: {}]
  %s2 = inlined_call_operand.vmem [shape: f32[2,8,256], index: 2, kind: output, shape index: {}]
  %s3 = sld [smem:[#allocation0]]
  $region41: #{spatial_gate_forward.5} parent=0
    _
  %s5 = ssub.s32 1, %s3
  %s6 = scalar_select 0, %s5, %s3
  loop: start=0, step=1, limit=4
  $region2: #{spatial_gate_forward.5} parent=0 // loop_pre_header
    _
  $region3: #{spatial_gate_forward.5} parent=0 // loop_header
    %s8 = sphi 0, %s12
    %p9 = scmp.ge.s32.totalorder %s8, 4
    %s15 = sphi 0, %s34
    %s16 = sphi 0, %s30
    %s17 = sphi 0, %s26
    %s18 = sphi 0, %s15
    %s19 = sphi 0, %s16
    %s20 = sphi 0, %s17
    %s21 = sphi 0, %s18
    %s22 = sphi 0, %s19
    %s23 = sphi 0, %s20
    %s41 = sphi 0, %s43
    %s44 = sphi 0, %s41
    %s45 = sphi 0, %s44
    %s61 = sphi 0, %s45
    %s69 = sphi 0, %s71
    %s72 = sphi 0, %s69
    %s73 = sphi 0, %s72
    %s89 = sphi 0, %s73
    %s99 = sphi 0, %s101
    %s102 = sphi 0, %s99
    %s103 = sphi 0, %s102
    %s119 = sphi 0, %s103
  $region4: #{spatial_gate_forward.5} parent=0 // loop_header_branch
    %11 = sbr.rel (%p9) target = $region8
  $region5: #{spatial_gate_forward.5} parent=0 // loop_body
    %s13 = ssub.s32 %s8, 1
    %s14 = ssub.s32 %s8, 2
    %s24 = sadd.s32 1, %s17
    %p25 = scmp.ge.s32.totalorder %s24, 1
    %s26 = scalar_select %p25, 0, %s24
    %s27 = sadd.s32 1, %s16
    %s28 = scalar_select %p25, %s27, %s16
    %p29 = scmp.ge.s32.totalorder %s28, 1
    %s30 = scalar_select %p29, 0, %s28
    %s31 = sadd.s32 1, %s15
    %s32 = scalar_select %p29, %s31, %s15
    %p33 = scmp.ge.s32.totalorder %s32, 2
    %s34 = scalar_select %p33, 0, %s32
    %s35 = ssub.s32 %s15, %s34
    %s36 = ssub.s32 %s16, %s30
    %s37 = sor.u32 %s35, %s36
    %s38 = ssub.s32 %s17, %s26
    %s39 = sor.u32 %s37, %s38
    %p40 = scmp.eq.s32.totalorder %s39, 0
    %s42 = sadd.s32 %s41, 1
    %s43 = scalar_select %p40, %s41, %s42
    %p46 = pneg %p40
    %p47 = scmp.eq.s32.totalorder %s8, 1
    %p48 = por %p46, %p47
    %p49 = scmp.ne.s32.totalorder %s41, %s44
    %p50 = scmp.eq.s32.totalorder %s8, 0
    %p51 = por %p49, %p50
    %p52 = scmp.ne.s32.totalorder %s41, %s44
    %p53 = scmp.eq.s32.totalorder %s13, 1
    %p54 = por %p52, %p53
    %p55 = scmp.ne.s32.totalorder %s44, %s45
    %p56 = scmp.eq.s32.totalorder %s13, 0
    %p57 = por %p55, %p56
    %p58 = scmp.ne.s32.totalorder %s44, %s45
    %p59 = scmp.eq.s32.totalorder %s14, 1
    %p60 = por %p58, %p59
    %p62 = scmp.ne.s32.totalorder %s45, %s61
    %p63 = scmp.eq.s32.totalorder %s14, 0
    %p64 = por %p62, %p63
    %s65 = ssub.s32 %s15, %s34
    %s66 = ssub.s32 %s17, %s26
    %s67 = sor.u32 %s65, %s66
    %p68 = scmp.eq.s32.totalorder %s67, 0
    %s70 = sadd.s32 %s69, 1
    %s71 = scalar_select %p68, %s69, %s70
    %p74 = pneg %p68
    %p75 = scmp.eq.s32.totalorder %s8, 1
    %p76 = por %p74, %p75
    %p77 = scmp.ne.s32.totalorder %s69, %s72
    %p78 = scmp.eq.s32.totalorder %s8, 0
    %p79 = por %p77, %p78
    %p80 = scmp.ne.s32.totalorder %s69, %s72
    %p81 = scmp.eq.s32.totalorder %s13, 1
    %p82 = por %p80, %p81
    %p83 = scmp.ne.s32.totalorder %s72, %s73
    %p84 = scmp.eq.s32.totalorder %s13, 0
    %p85 = por %p83, %p84
    %p86 = scmp.ne.s32.totalorder %s72, %s73
    %p87 = scmp.eq.s32.totalorder %s14, 1
    %p88 = por %p86, %p87
    %p90 = scmp.ne.s32.totalorder %s73, %s89
    %p91 = scmp.eq.s32.totalorder %s14, 0
    %p92 = por %p90, %p91
    %s93 = ssub.s32 %s15, %s34
    %s94 = ssub.s32 %s16, %s30
    %s95 = sor.u32 %s93, %s94
    %s96 = ssub.s32 %s17, %s26
    %s97 = sor.u32 %s95, %s96
    %p98 = scmp.eq.s32.totalorder %s97, 0
    %s100 = sadd.s32 %s99, 1
    %s101 = scalar_select %p98, %s99, %s100
    %p104 = pneg %p98
    %p105 = scmp.eq.s32.totalorder %s8, 1
    %p106 = por %p104, %p105
    %p107 = scmp.ne.s32.totalorder %s99, %s102
    %p108 = scmp.eq.s32.totalorder %s8, 0
    %p109 = por %p107, %p108
    %p110 = scmp.ne.s32.totalorder %s99, %s102
    %p111 = scmp.eq.s32.totalorder %s13, 1
    %p112 = por %p110, %p111
    %p113 = scmp.ne.s32.totalorder %s102, %s103
    %p114 = scmp.eq.s32.totalorder %s13, 0
    %p115 = por %p113, %p114
    %p116 = scmp.ne.s32.totalorder %s102, %s103
    %p117 = scmp.eq.s32.totalorder %s14, 1
    %p118 = por %p116, %p117
    %p120 = scmp.ne.s32.totalorder %s103, %s119
    %p121 = scmp.eq.s32.totalorder %s14, 0
    %p122 = por %p120, %p121
    %p123 = scmp.le.s32.totalorder 1, %s8
    %p124 = scmp.lt.s32.totalorder %s8, 3
    %p125 = pnand %p123, %p124
    %p126 = pneg %p125
    // Predicated region
    $region9: #{spatial_gate_forward.5} parent=5 // pred_check
      _
    $region10: #{spatial_gate_forward.5} parent=5 // pred_check_branch
      %128 = sbr.rel (%p125) target = $region12
    $region11: #{spatial_gate_forward.5} parent=5 // pred_region
      %s129 = ssub.s32 %s8, 1
    $region12: #{spatial_gate_forward.5} parent=5 // pred_fallthru
      _
    %p130 = scmp.lt.s32.totalorder %s8, 2
    // Predicated region
    $region13: #{spatial_gate_forward.5} parent=5 // pred_check
      %p131 = pneg %p130
    $region14: #{spatial_gate_forward.5} parent=5 // pred_check_branch
      %133 = sbr.rel (%p131) target = $region16
    $region15: #{spatial_gate_forward.5} parent=5 // pred_region
      // Predicated region
      $region17: #{spatial_gate_forward.5} parent=15 // pred_check
        %p134 = pneg %p51
      $region18: #{spatial_gate_forward.5} parent=15 // pred_check_branch
        %136 = sbr.rel (%p134) target = $region20
      $region19: #{spatial_gate_forward.5} parent=15 // pred_region
        %s137 = smul.u32 2, %s17
        %p138 = scmp.lt.s32.totalorder %s15, 1
        %s139 = scalar_select %p138, %s15, 1
        %p140 = scmp.lt.s32.totalorder %s16, 0
        %s141 = scalar_select %p140, %s16, 0
        %p142 = scmp.lt.s32.totalorder %s137, 1
        %s143 = scalar_select %p142, %s137, 1
        %s144 = smul.addr %s141, 2
        %s145 = sadd.s32 %s143, %s144
        %s146 = smul.addr %s139, 2
        %s147 = sadd.s32 %s145, %s146
        %s148 = smul.addr %s147, 8
        %s149 = scalar_lea.vmem %s0, %s148
        %s150 = smul.u32 2, %s17
      $region20: #{spatial_gate_forward.5} parent=15 // pred_fallthru
        _
      // Predicated region
      $region21: #{spatial_gate_forward.5} parent=15 // pred_check
        %p151 = pneg %p79
      $region22: #{spatial_gate_forward.5} parent=15 // pred_check_branch
        %153 = sbr.rel (%p151) target = $region24
      $region23: #{spatial_gate_forward.5} parent=15 // pred_region
        %s154 = smul.u32 2, %s17
        %p155 = scmp.lt.s32.totalorder %s15, 1
        %s156 = scalar_select %p155, %s15, 1
        %p157 = scmp.lt.s32.totalorder %s154, 1
        %s158 = scalar_select %p157, %s154, 1
        %s159 = smul.addr %s156, 2
        %s160 = sadd.s32 %s158, %s159
        %s161 = scalar_lea.vmem %s1, %s160
        %s162 = smul.u32 2, %s17
      $region24: #{spatial_gate_forward.5} parent=15 // pred_fallthru
        _
    $region16: #{spatial_gate_forward.5} parent=5 // pred_fallthru
      _
    %p163 = scmp.le.s32.totalorder 1, %s8
    %p164 = scmp.lt.s32.totalorder %s8, 3
    %p165 = pnand %p163, %p164
    %p166 = pneg %p165
    // Predicated region
    $region25: #{spatial_gate_forward.5} parent=5 // pred_check
      _
    $region26: #{spatial_gate_forward.5} parent=5 // pred_check_branch
      %168 = sbr.rel (%p165) target = $region28
    $region27: #{spatial_gate_forward.5} parent=5 // pred_region
      %s169 = ssub.s32 %s8, 1
      %s170 = smul.u32 2, %s20
      %p171 = scmp.lt.s32.totalorder %s18, 1
      %s172 = scalar_select %p171, %s18, 1
      %p173 = scmp.lt.s32.totalorder %s19, 0
      %s174 = scalar_select %p173, %s19, 0
      %p175 = scmp.lt.s32.totalorder %s170, 1
      %s176 = scalar_select %p175, %s170, 1
      %s177 = smul.addr %s174, 2
      %s178 = sadd.s32 %s176, %s177
      %s179 = smul.addr %s172, 2
      %s180 = sadd.s32 %s178, %s179
      %s181 = smul.addr %s180, 8
      %s182 = scalar_lea.vmem %s0, %s181
      %p183 = pneg %p57
      %p184 = pneg %p54
      %s185 = smul.u32 2, %s20
      %p186 = scmp.lt.s32.totalorder %s18, 1
      %s187 = scalar_select %p186, %s18, 1
      %p188 = scmp.lt.s32.totalorder %s185, 1
      %s189 = scalar_select %p188, %s185, 1
      %s190 = smul.addr %s187, 2
      %s191 = sadd.s32 %s189, %s190
      %s192 = scalar_lea.vmem %s1, %s191
      %p193 = pneg %p85
      %p194 = pneg %p82
      %p195 = pneg %p115
      %p196 = pneg %p112
      %s197 = smul.u32 2, %s20
      %p198 = scmp.lt.s32.totalorder %s18, 1
      %s199 = scalar_select %p198, %s18, 1
      %p200 = scmp.lt.s32.totalorder %s19, 0
      %s201 = scalar_select %p200, %s19, 0
      %p202 = scmp.lt.s32.totalorder %s197, 1
      %s203 = scalar_select %p202, %s197, 1
      %s204 = smul.addr %s201, 2
      %s205 = sadd.s32 %s203, %s204
      %s206 = smul.addr %s199, 2
      %s207 = sadd.s32 %s205, %s206
      %s208 = smul.addr %s207, 8
      %s209 = scalar_lea.vmem %s2, %s208
      %s210 = smul.u32 2, %s20
      %p211 = scmp.lt.s32.totalorder %s18, 1
      %s212 = scalar_select %p211, %s18, 1
      %p213 = scmp.lt.s32.totalorder %s19, 0
      %s214 = scalar_select %p213, %s19, 0
      %p215 = scmp.lt.s32.totalorder %s210, 1
      %s216 = scalar_select %p215, %s210, 1
      %s217 = smul.addr %s214, 2
      %s218 = sadd.s32 %s216, %s217
      %s219 = smul.addr %s212, 2
      %s220 = sadd.s32 %s218, %s219
      %s221 = smul.addr %s220, 8
      %s222 = scalar_lea.vmem %s0, %s221
      %s223 = smul.u32 2, %s20
      %s224 = smul.u32 2, %s20
      %p225 = scmp.lt.s32.totalorder %s18, 1
      %s226 = scalar_select %p225, %s18, 1
      %p227 = scmp.lt.s32.totalorder %s224, 1
      %s228 = scalar_select %p227, %s224, 1
      %s229 = smul.addr %s226, 2
      %s230 = sadd.s32 %s228, %s229
      %s231 = scalar_lea.vmem %s1, %s230
      %s232 = smul.u32 2, %s20
      %s233 = smul.u32 2, %s20
      %p234 = scmp.lt.s32.totalorder %s18, 1
      %s235 = scalar_select %p234, %s18, 1
      %p236 = scmp.lt.s32.totalorder %s19, 0
      %s237 = scalar_select %p236, %s19, 0
      %p238 = scmp.lt.s32.totalorder %s233, 1
      %s239 = scalar_select %p238, %s233, 1
      %s240 = smul.addr %s237, 2
      %s241 = sadd.s32 %s239, %s240
      %s242 = smul.addr %s235, 2
      %s243 = sadd.s32 %s241, %s242
      %s244 = smul.addr %s243, 8
      %s245 = scalar_lea.vmem %s2, %s244
      %s246 = smul.u32 2, %s20
      %v247 = vld [vmem:[%s222] sm:$0xff]
      %v248 = vld [vmem:[%s222 + $0x8] sm:$0xff]
      %v249 = vld [vmem:[%s231] sm:$0x3]
      %v251 = vperm.slane %v249, 0
      %v252 = vperm.slane %v249, 1
      %v255 = vmul.f32 %v247, %v251
      %v256 = vmul.f32 %v248, %v252
      %257 = vst [vmem:[%s245] sm:$0xff] %v255
      %258 = vst [vmem:[%s245 + $0x8] sm:$0xff] %v256
      %s259 = smul.u32 2, %s20
      %p260 = scmp.lt.s32.totalorder %s18, 1
      %s261 = scalar_select %p260, %s18, 1
      %p262 = scmp.lt.s32.totalorder %s19, 0
      %s263 = scalar_select %p262, %s19, 0
      %p264 = scmp.lt.s32.totalorder %s259, 1
      %s265 = scalar_select %p264, %s259, 1
      %s266 = smul.addr %s263, 2
      %s267 = sadd.s32 %s265, %s266
      %s268 = smul.addr %s261, 2
      %s269 = sadd.s32 %s267, %s268
      %s270 = smul.addr %s269, 8
      %s271 = scalar_lea.vmem %s2, %s270
      // Predicated region
      $region29: #{spatial_gate_forward.5} parent=27 // pred_check
        %p272 = pneg %p112
      $region30: #{spatial_gate_forward.5} parent=27 // pred_check_branch
        %274 = sbr.rel (%p272) target = $region32
      $region31: #{spatial_gate_forward.5} parent=27 // pred_region
        %s275 = smul.u32 2, %s20
      $region32: #{spatial_gate_forward.5} parent=27 // pred_fallthru
        _
    $region28: #{spatial_gate_forward.5} parent=5 // pred_fallthru
      _
    %p276 = scmp.le.s32.totalorder 2, %s8
    // Predicated region
    $region33: #{spatial_gate_forward.5} parent=5 // pred_check
      %p277 = pneg %p276
    $region34: #{spatial_gate_forward.5} parent=5 // pred_check_branch
      %279 = sbr.rel (%p277) target = $region36
    $region35: #{spatial_gate_forward.5} parent=5 // pred_region
      %s280 = ssub.s32 %s8, 2
      // Predicated region
      $region37: #{spatial_gate_forward.5} parent=35 // pred_check
        %p281 = pneg %p118
      $region38: #{spatial_gate_forward.5} parent=35 // pred_check_branch
        %283 = sbr.rel (%p281) target = $region40
      $region39: #{spatial_gate_forward.5} parent=35 // pred_region
        %s284 = smul.u32 2, %s23
        %p285 = scmp.lt.s32.totalorder %s21, 1
        %s286 = scalar_select %p285, %s21, 1
        %p287 = scmp.lt.s32.totalorder %s22, 0
        %s288 = scalar_select %p287, %s22, 0
        %p289 = scmp.lt.s32.totalorder %s284, 1
        %s290 = scalar_select %p289, %s284, 1
        %s291 = smul.addr %s288, 2
        %s292 = sadd.s32 %s290, %s291
        %s293 = smul.addr %s286, 2
        %s294 = sadd.s32 %s292, %s293
        %s295 = smul.addr %s294, 8
        %s296 = scalar_lea.vmem %s2, %s295
      $region40: #{spatial_gate_forward.5} parent=35 // pred_fallthru
        _
    $region36: #{spatial_gate_forward.5} parent=5 // pred_fallthru
      _
  $region6: #{spatial_gate_forward.5} parent=0 // loop_footer
    %s12 = sadd.s32 1, %s8
  $region7: #{spatial_gate_forward.5} parent=0 // loop_footer_branch
    %7 = sbr.rel target = $region3
  $region8: #{spatial_gate_forward.5} parent=0 // loop_exit
    _

</llo_original>
